<compile_context>
chip_gen: v5e
topology: v5e:2x2
jax: 0.10.0
libtpu: 0.0.40
codegen_flags: <defaults>
</compile_context>

<pallas_src>
import functools

import jax
import jax.numpy as jnp
from jax.experimental import pallas as pl
from jax.experimental.pallas import tpu as pltpu

LANE = 128
SUBLANE = 8


def _round_up(x, m):
    return (x + m - 1) // m * m


def _mlp_kernel(tok_ref, table_ref, w1_ref, b1_ref, w2_ref, b2_ref, out_ref,
                *, inv_len):
    # tok_ref:   (TB, L, 1) int32
    # table_ref: (Vp, Ep) bf16   w1_ref: (Ep, Ep) bf16   b1_ref: (1, Ep) f32
    # w2_ref:    (Ep, Np) bf16   b2_ref: (1, Np)  f32    out_ref: (TB, Np) f32
    TB, L, _ = tok_ref.shape
    Vp = table_ref.shape[0]

    # Fused embedding lookup + sequence mean:
    # one-hot counts over vocab lanes, then an MXU matmul with the bf16 table.
    tok = tok_ref[...]                                               # (TB, L, 1)
    vocab_ids = jax.lax.broadcasted_iota(jnp.int32, (TB, L, Vp), 2)
    onehot = (tok == vocab_ids).astype(jnp.float32)                 # (TB, L, Vp)
    counts = jnp.sum(onehot, axis=1) * inv_len                      # (TB, Vp)

    # counts values are k/L (exact in bf16 for power-of-two L); f32 accumulate.
    mean_emb = jnp.dot(counts.astype(jnp.bfloat16), table_ref[...],
                       preferred_element_type=jnp.float32)          # (TB, Ep)

    # Linear 1 + ReLU (bf16 operands, f32 accumulation + bias).
    h = jnp.dot(mean_emb.astype(jnp.bfloat16), w1_ref[...],
                preferred_element_type=jnp.float32)
    h = jnp.maximum(h + b1_ref[...], 0.0)

    # Dropout: eval-mode identity.

    # Linear 2 (lane-dense padded output -> unmasked stores).
    o = jnp.dot(h.astype(jnp.bfloat16), w2_ref[...],
                preferred_element_type=jnp.float32)
    out_ref[...] = (o + b2_ref[...]).astype(out_ref.dtype)


def prepare_params(embedding_table, w1, b1, w2, b2, num_classes=2):
    """Zero-pad parameters ONCE to lane-aligned shapes; weights in bf16.

    w1/w2 are expected transposed relative to nn.Linear storage, i.e. shaped
    (in_features, out_features) so the kernel computes x @ W + b.
    """
    V, E = embedding_table.shape
    Vp = _round_up(V, LANE)
    Ep = _round_up(E, LANE)
    Np = _round_up(num_classes, LANE)
    bf16, f32 = jnp.bfloat16, jnp.float32
    table_p = jnp.zeros((Vp, Ep), bf16).at[:V, :E].set(embedding_table.astype(bf16))
    w1_p = jnp.zeros((Ep, Ep), bf16).at[:E, :E].set(w1.astype(bf16))
    b1_p = jnp.zeros((1, Ep), f32).at[0, :E].set(b1.astype(f32))
    w2_p = jnp.zeros((Ep, Np), bf16).at[:E, :num_classes].set(w2.astype(bf16))
    b2_p = jnp.zeros((1, Np), f32).at[0, :num_classes].set(b2.astype(f32))
    return table_p, w1_p, b1_p, w2_p, b2_p


def sentiment_mlp_forward(token_ids, padded_params, num_classes=2,
                          batch_tile=128):
    """token_ids: (B, L) int32.  Returns (B, num_classes) float32 logits."""
    table_p, w1_p, b1_p, w2_p, b2_p = padded_params
    B, L = token_ids.shape
    Vp, Ep = table_p.shape
    Np = w2_p.shape[1]

    # Batch tile: up to `batch_tile` rows per MXU pass, sublane-aligned, and
    # no bigger than the (padded) batch so tiny batches stay a single tile.
    TB = min(batch_tile, _round_up(B, SUBLANE))
    Bp = _round_up(B, TB)

    # Pad batch; token ids pre-expanded to (Bp, L, 1) so the in-kernel vocab
    # comparison is a pure lane broadcast.  Padded rows (id 0) are computed
    # and discarded by the wrapper slice below.
    tok = jnp.zeros((Bp, L, 1), jnp.int32).at[:B, :, 0].set(
        token_ids.astype(jnp.int32))

    grid = (Bp // TB,)
    out = pl.pallas_call(
        functools.partial(_mlp_kernel, inv_len=1.0 / L),
        out_shape=jax.ShapeDtypeStruct((Bp, Np), jnp.float32),
        grid_spec=pltpu.PrefetchScalarGridSpec(
            num_scalar_prefetch=0,
            grid=grid,
            in_specs=[
                # Token tiles stream with the batch grid.
                pl.BlockSpec((TB, L, 1), lambda i: (i, 0, 0)),
                # Weights/biases: constant index_map -> DMA'd once, VMEM-resident.
                pl.BlockSpec((Vp, Ep), lambda i: (0, 0)),
                pl.BlockSpec((Ep, Ep), lambda i: (0, 0)),
                pl.BlockSpec((1, Ep), lambda i: (0, 0)),
                pl.BlockSpec((Ep, Np), lambda i: (0, 0)),
                pl.BlockSpec((1, Np), lambda i: (0, 0)),
            ],
            out_specs=pl.BlockSpec((TB, Np), lambda i: (i, 0)),
        ),
        compiler_params=pltpu.CompilerParams(
            dimension_semantics=("parallel",)),
    )(tok, table_p, w1_p, b1_p, w2_p, b2_p)
    return out[:B, :num_classes]


def _reference_forward(token_ids, embedding_table, w1, b1, w2, b2):
    """Pure-JAX f32 reference with the given (possibly quantized) params."""
    emb = jnp.take(embedding_table, token_ids, axis=0)        # (B, L, E)
    mean = jnp.mean(emb, axis=1)                              # (B, E)
    h = jnp.maximum(mean @ w1 + b1, 0.0)
    return h @ w2 + b2


def _reference_forward_matched(token_ids, table_bf, w1_bf, b1, w2_bf, b2):
    """Reference that mirrors the kernel's bf16-operand / f32-accum precision."""
    f32 = jnp.float32
    emb = jnp.take(table_bf.astype(f32), token_ids, axis=0)
    mean = jnp.mean(emb, axis=1)
    mean_bf = mean.astype(jnp.bfloat16).astype(f32)
    h = jnp.maximum(mean_bf @ w1_bf.astype(f32) + b1, 0.0)
    h_bf = h.astype(jnp.bfloat16).astype(f32)
    return h_bf @ w2_bf.astype(f32) + b2


if __name__ == "__main__":
    # Small, deterministic problem sizes consistent with the module.
    vocab_size = 50
    embed_size = 100   # module-level constant in the PyTorch file
    num_classes = 2
    B, L = 4, 8

    key = jax.random.PRNGKey(0)
    k_tok, k_emb, k_w1, k_b1, k_w2, k_b2 = jax.random.split(key, 6)

    token_ids = jax.random.randint(k_tok, (B, L), 0, vocab_size, dtype=jnp.int32)

    # Deterministic parameter init (shapes from the module's __init__).
    embedding_table = jax.random.normal(k_emb, (vocab_size, embed_size), jnp.float32)
    # nn.Linear stores (out, in); we pass transposed (in, out) for x @ W.
    w1 = jax.random.normal(k_w1, (embed_size, embed_size), jnp.float32) * 0.05
    b1 = jax.random.normal(k_b1, (embed_size,), jnp.float32) * 0.05
    w2 = jax.random.normal(k_w2, (embed_size, num_classes), jnp.float32) * 0.05
    b2 = jax.random.normal(k_b2, (num_classes,), jnp.float32) * 0.05

    padded_params = prepare_params(embedding_table, w1, b1, w2, b2, num_classes)

    out = sentiment_mlp_forward(token_ids, padded_params, num_classes)
    out = jax.block_until_ready(out)
    assert out.shape == (B, num_classes), out.shape

    # (1) Tight check against a reference that uses the same bf16 weights /
    #     activation casts as the kernel (validates kernel logic exactly).
    ref_matched = _reference_forward_matched(
        token_ids,
        embedding_table.astype(jnp.bfloat16),
        w1.astype(jnp.bfloat16), b1,
        w2.astype(jnp.bfloat16), b2)
    assert jnp.allclose(out, ref_matched, atol=1e-3, rtol=1e-3), (out, ref_matched)

    # (2) Loose check against the full-f32 reference (bounds bf16 quant error).
    ref_f32 = _reference_forward(token_ids, embedding_table, w1, b1, w2, b2)
    assert jnp.allclose(out, ref_f32, atol=5e-2, rtol=5e-2), (out, ref_f32)

    print("KERNEL_OK")
</pallas_src>

<mosaic_0001>
module attributes {stable_mosaic.version = 11 : i64} {
  func.func @_mlp_kernel(%arg0: i32, %arg1: memref<8x8x1xi32, #tpu.memory_space<vmem>>, %arg2: memref<128x128xbf16, #tpu.memory_space<vmem>>, %arg3: memref<128x128xbf16, #tpu.memory_space<vmem>>, %arg4: memref<1x128xf32, #tpu.memory_space<vmem>>, %arg5: memref<128x128xbf16, #tpu.memory_space<vmem>>, %arg6: memref<1x128xf32, #tpu.memory_space<vmem>>, %arg7: memref<8x128xf32, #tpu.memory_space<vmem>>) attributes {dimension_semantics = [#tpu.dimension_semantics<parallel>], iteration_bounds = array<i64: 1>, scalar_prefetch = 0 : i64, scratch_operands = 0 : i64, tpu.core_type = #tpu.core_type<tc>, window_params = [{transform_indices = @transform_0, window_bounds = array<i64: 8, 8, 1>}, {pipeline_mode = #tpu.pipeline_mode<synchronous>, transform_indices = @transform_1, window_bounds = array<i64: 128, 128>}, {pipeline_mode = #tpu.pipeline_mode<synchronous>, transform_indices = @transform_2, window_bounds = array<i64: 128, 128>}, {pipeline_mode = #tpu.pipeline_mode<synchronous>, transform_indices = @transform_3, window_bounds = array<i64: 1, 128>}, {pipeline_mode = #tpu.pipeline_mode<synchronous>, transform_indices = @transform_4, window_bounds = array<i64: 128, 128>}, {pipeline_mode = #tpu.pipeline_mode<synchronous>, transform_indices = @transform_5, window_bounds = array<i64: 1, 128>}, {transform_indices = @transform_6, window_bounds = array<i64: 8, 128>}]} {
    %c0 = arith.constant 0 : index
    %c0_0 = arith.constant 0 : index
    %c0_1 = arith.constant 0 : index
    %0 = vector.load %arg1[%c0, %c0_0, %c0_1] : memref<8x8x1xi32, #tpu.memory_space<vmem>>, vector<8x8x1xi32>
    %1 = tpu.iota {dimensions = array<i32: 2>} : vector<8x8x128xi32>
    %2 = vector.broadcast %0 : vector<8x8x1xi32> to vector<8x8x128xi32>
    %3 = arith.cmpi eq, %2, %1 : vector<8x8x128xi32>
    %4 = arith.extui %3 : vector<8x8x128xi1> to vector<8x8x128xi32>
    %5 = arith.sitofp %4 : vector<8x8x128xi32> to vector<8x8x128xf32>
    %cst = arith.constant dense<0.000000e+00> : vector<8x128xf32>
    %6 = vector.multi_reduction <add>, %5, %cst [1] : vector<8x8x128xf32> to vector<8x128xf32>
    %cst_2 = arith.constant 1.250000e-01 : f32
    %7 = vector.broadcast %cst_2 : f32 to vector<8x128xf32>
    %8 = arith.mulf %6, %7 : vector<8x128xf32>
    %9 = arith.truncf %8 : vector<8x128xf32> to vector<8x128xbf16>
    %c0_3 = arith.constant 0 : index
    %c0_4 = arith.constant 0 : index
    %10 = vector.load %arg2[%c0_3, %c0_4] : memref<128x128xbf16, #tpu.memory_space<vmem>>, vector<128x128xbf16>
    %cst_5 = arith.constant dense<0.000000e+00> : vector<8x128xf32>
    %11 = tpu.matmul %9, %10, %cst_5 {dimension_numbers = #tpu.dot_dimension_numbers<[1], [0], [0], [1], [0, 0, 1, 1], [], []>} : vector<8x128xbf16>, vector<128x128xbf16>, vector<8x128xf32> -> vector<8x128xf32>
    %12 = arith.truncf %11 : vector<8x128xf32> to vector<8x128xbf16>
    %c0_6 = arith.constant 0 : index
    %c0_7 = arith.constant 0 : index
    %13 = vector.load %arg3[%c0_6, %c0_7] : memref<128x128xbf16, #tpu.memory_space<vmem>>, vector<128x128xbf16>
    %cst_8 = arith.constant dense<0.000000e+00> : vector<8x128xf32>
    %14 = tpu.matmul %12, %13, %cst_8 {dimension_numbers = #tpu.dot_dimension_numbers<[1], [0], [0], [1], [0, 0, 1, 1], [], []>} : vector<8x128xbf16>, vector<128x128xbf16>, vector<8x128xf32> -> vector<8x128xf32>
    %c0_9 = arith.constant 0 : index
    %c0_10 = arith.constant 0 : index
    %15 = vector.load %arg4[%c0_9, %c0_10] : memref<1x128xf32, #tpu.memory_space<vmem>>, vector<1x128xf32>
    %16 = vector.broadcast %15 : vector<1x128xf32> to vector<8x128xf32>
    %17 = arith.addf %14, %16 : vector<8x128xf32>
    %cst_11 = arith.constant 0.000000e+00 : f32
    %18 = vector.broadcast %cst_11 : f32 to vector<8x128xf32>
    %19 = arith.maximumf %17, %18 : vector<8x128xf32>
    %20 = arith.truncf %19 : vector<8x128xf32> to vector<8x128xbf16>
    %c0_12 = arith.constant 0 : index
    %c0_13 = arith.constant 0 : index
    %21 = vector.load %arg5[%c0_12, %c0_13] : memref<128x128xbf16, #tpu.memory_space<vmem>>, vector<128x128xbf16>
    %cst_14 = arith.constant dense<0.000000e+00> : vector<8x128xf32>
    %22 = tpu.matmul %20, %21, %cst_14 {dimension_numbers = #tpu.dot_dimension_numbers<[1], [0], [0], [1], [0, 0, 1, 1], [], []>} : vector<8x128xbf16>, vector<128x128xbf16>, vector<8x128xf32> -> vector<8x128xf32>
    %c0_15 = arith.constant 0 : index
    %c0_16 = arith.constant 0 : index
    %23 = vector.load %arg6[%c0_15, %c0_16] : memref<1x128xf32, #tpu.memory_space<vmem>>, vector<1x128xf32>
    %24 = vector.broadcast %23 : vector<1x128xf32> to vector<8x128xf32>
    %25 = arith.addf %22, %24 : vector<8x128xf32>
    %c0_17 = arith.constant 0 : index
    %c0_18 = arith.constant 0 : index
    %26 = vector.load %arg7[%c0_17, %c0_18] : memref<8x128xf32, #tpu.memory_space<vmem>>, vector<8x128xf32>
    tpu.vector_store %arg7[%c0_17, %c0_18], %25 {strides = array<i32>} : memref<8x128xf32, #tpu.memory_space<vmem>>, vector<8x128xf32>,
    return
  }
  func.func @transform_0(%arg0: i32) -> (i32, i32, i32) {
    %c0_i32 = arith.constant 0 : i32
    %c0_i32_0 = arith.constant 0 : i32
    %c0_i32_1 = arith.constant 0 : i32
    return %arg0, %c0_i32, %c0_i32_0 : i32, i32, i32
  }
  func.func @transform_1(%arg0: i32) -> (i32, i32) {
    %c0_i32 = arith.constant 0 : i32
    %c0_i32_0 = arith.constant 0 : i32
    %c0_i32_1 = arith.constant 0 : i32
    return %c0_i32, %c0_i32_0 : i32, i32
  }
  func.func @transform_2(%arg0: i32) -> (i32, i32) {
    %c0_i32 = arith.constant 0 : i32
    %c0_i32_0 = arith.constant 0 : i32
    %c0_i32_1 = arith.constant 0 : i32
    return %c0_i32, %c0_i32_0 : i32, i32
  }
  func.func @transform_3(%arg0: i32) -> (i32, i32) {
    %c0_i32 = arith.constant 0 : i32
    %c0_i32_0 = arith.constant 0 : i32
    %c0_i32_1 = arith.constant 0 : i32
    return %c0_i32, %c0_i32_0 : i32, i32
  }
  func.func @transform_4(%arg0: i32) -> (i32, i32) {
    %c0_i32 = arith.constant 0 : i32
    %c0_i32_0 = arith.constant 0 : i32
    %c0_i32_1 = arith.constant 0 : i32
    return %c0_i32, %c0_i32_0 : i32, i32
  }
  func.func @transform_5(%arg0: i32) -> (i32, i32) {
    %c0_i32 = arith.constant 0 : i32
    %c0_i32_0 = arith.constant 0 : i32
    %c0_i32_1 = arith.constant 0 : i32
    return %c0_i32, %c0_i32_0 : i32, i32
  }
  func.func @transform_6(%arg0: i32) -> (i32, i32) {
    %c0_i32 = arith.constant 0 : i32
    %c0_i32_0 = arith.constant 0 : i32
    return %arg0, %c0_i32 : i32, i32
  }
}

</mosaic_0001>

<llo_original>
// kernel: tpu_custom_call.1
$region0: #{tpu_custom_call.1}
  #allocation0 [shape = 'u32[]', space=smem, size = 0x4, offset = 0x4, fixed_abs, tag = 'smem constant byte address 0x4 - core index']
  #allocation1 [shape = 'u32[72,128]{1,0:T(1,128)}', space=vmem, size = 0x9000, scoped, tag = 'internal scratch']
  %s0 = inlined_call_operand.vmem [shape: s32[8,8,1], index: 0, kind: input, shape index: {}]
  %s1 = inlined_call_operand.vmem [shape: bf16[128,128], index: 1, kind: input, shape index: {}]
  %s2 = inlined_call_operand.hbm [shape: bf16[128,128], index: 2, kind: input, shape index: {}]
  %s3 = inlined_call_operand.vmem [shape: f32[1,128], index: 3, kind: input, shape index: {}]
  %s4 = inlined_call_operand.hbm [shape: bf16[128,128], index: 4, kind: input, shape index: {}]
  %s5 = inlined_call_operand.vmem [shape: f32[1,128], index: 5, kind: input, shape index: {}]
  %s6 = inlined_call_operand.hbm [shape: f32[8,128], index: 6, kind: output, shape index: {}]
  %s7 = sld [smem:[#allocation0]]
  $region42: #{tpu_custom_call.1} parent=0
    _
  %s9 = ssub.s32 1, %s7
  %s10 = scalar_select 0, %s9, %s7
  $region1: #{tpu_custom_call.1} parent=0
    #allocation2 [shape = 'u8[32768]{0}', space=vmem, size = 0x8000, scoped, tag = 'input window, operand 2, single buffered']
    #allocation3 [shape = 's32[1]{0}', space=sflag, size = 0x4, scoped, tag = 'scoped memory for tpu_custom_call.1']
    #allocation4 [shape = 's32[1]{0}', space=sflag, size = 0x4, scoped, tag = 'scoped memory for tpu_custom_call.1']
    #allocation5 [shape = 'u8[32768]{0}', space=vmem, size = 0x8000, scoped, tag = 'input window, operand 4, single buffered']
    #allocation6 [shape = 's32[1]{0}', space=sflag, size = 0x4, scoped, tag = 'scoped memory for tpu_custom_call.1']
    #allocation7 [shape = 'u8[4096]{0}', space=vmem, size = 0x1000, scoped, tag = 'output window, operand 0, single buffered']
    %11 = vsyncpa [#allocation3], 0
    %12 = vsyncpa [#allocation6], 0
    %13 = vsyncpa [#allocation4], 0
    // Predicated region
    $region2: #{tpu_custom_call.1} parent=1 // pred_check
      _
    $region3: #{tpu_custom_call.1} parent=1 // pred_check_branch
      %15 = sbr.rel (0) target = $region5
    $region4: #{tpu_custom_call.1} parent=1 // pred_region
      _
    $region5: #{tpu_custom_call.1} parent=1 // pred_fallthru
      _
    // Predicated region
    $region6: #{tpu_custom_call.1} parent=1 // pred_check
      _
    $region7: #{tpu_custom_call.1} parent=1 // pred_check_branch
      %17 = sbr.rel (0) target = $region9
    $region8: #{tpu_custom_call.1} parent=1 // pred_region
      _
    $region9: #{tpu_custom_call.1} parent=1 // pred_fallthru
      _
    // Predicated region
    $region10: #{tpu_custom_call.1} parent=1 // pred_check
      _
    $region11: #{tpu_custom_call.1} parent=1 // pred_check_branch
      %19 = sbr.rel (0) target = $region13
    $region12: #{tpu_custom_call.1} parent=1 // pred_region
      %21 = vsyncadd [#allocation3], 0
      %s22 = sshll.u32 %s2, 4
      %s23 = int_to_ptr.hbm [resolvable:$true] %s22
      %s24 = sshll.u32 [#allocation2], 4
      %s25 = int_to_ptr.vmem [resolvable:$true] %s24
      %30 = dma.hbm_to_vmem [thread:$0]  %s23, 1024, %s25, [#allocation3], 64, 64, 4
    $region13: #{tpu_custom_call.1} parent=1 // pred_fallthru
      _
    // Predicated region
    $region14: #{tpu_custom_call.1} parent=1 // pred_check
      _
    $region15: #{tpu_custom_call.1} parent=1 // pred_check_branch
      %32 = sbr.rel (0) target = $region17
    $region16: #{tpu_custom_call.1} parent=1 // pred_region
      _
    $region17: #{tpu_custom_call.1} parent=1 // pred_fallthru
      _
    // Predicated region
    $region18: #{tpu_custom_call.1} parent=1 // pred_check
      _
    $region19: #{tpu_custom_call.1} parent=1 // pred_check_branch
      %34 = sbr.rel (0) target = $region21
    $region20: #{tpu_custom_call.1} parent=1 // pred_region
      %36 = vsyncadd [#allocation6], 0
      %s37 = sshll.u32 %s4, 4
      %s38 = int_to_ptr.hbm [resolvable:$true] %s37
      %s39 = sshll.u32 [#allocation5], 4
      %s40 = int_to_ptr.vmem [resolvable:$true] %s39
      %45 = dma.hbm_to_vmem [thread:$0]  %s38, 1024, %s40, [#allocation6], 64, 64, 4
    $region21: #{tpu_custom_call.1} parent=1 // pred_fallthru
      _
    // Predicated region
    $region22: #{tpu_custom_call.1} parent=1 // pred_check
      _
    $region23: #{tpu_custom_call.1} parent=1 // pred_check_branch
      %47 = sbr.rel (0) target = $region25
    $region24: #{tpu_custom_call.1} parent=1 // pred_region
      _
    $region25: #{tpu_custom_call.1} parent=1 // pred_fallthru
      _
    // Predicated region
    $region26: #{tpu_custom_call.1} parent=1 // pred_check
      _
    $region27: #{tpu_custom_call.1} parent=1 // pred_check_branch
      %49 = sbr.rel (0) target = $region29
    $region28: #{tpu_custom_call.1} parent=1 // pred_region
      %51 = dma.done [#allocation3], 1024
    $region29: #{tpu_custom_call.1} parent=1 // pred_fallthru
      _
    // Predicated region
    $region30: #{tpu_custom_call.1} parent=1 // pred_check
      _
    $region31: #{tpu_custom_call.1} parent=1 // pred_check_branch
      %53 = sbr.rel (0) target = $region33
    $region32: #{tpu_custom_call.1} parent=1 // pred_region
      %55 = dma.done [#allocation6], 1024
    $region33: #{tpu_custom_call.1} parent=1 // pred_fallthru
      _
    %v56 = vld [vmem:[%s0] sm:$0xff]
    %v57 = vld [vmem:[%s0 + $0x8] sm:$0xff]
    %v58 = vld [vmem:[%s0 + $0x10] sm:$0xff]
    %v59 = vld [vmem:[%s0 + $0x18] sm:$0xff]
    %v60 = vld [vmem:[%s0 + $0x20] sm:$0xff]
    %v61 = vld [vmem:[%s0 + $0x28] sm:$0xff]
    %v62 = vld [vmem:[%s0 + $0x30] sm:$0xff]
    %v63 = vld [vmem:[%s0 + $0x38] sm:$0xff]
    %v64 = vlaneseq
    %v65 = vand.u32 %v64, 127
    %66 = vset.pattern.permute.xlu0 0
    %67 = vperm.xlu0 %66, %v56
    %v68 = vpop.permute.xlu0 %67
    %69 = vset.pattern.permute.xlu0 0
    %70 = vperm.xlu0 %69, %v57
    %v71 = vpop.permute.xlu0 %70
    %72 = vset.pattern.permute.xlu0 0
    %73 = vperm.xlu0 %72, %v58
    %v74 = vpop.permute.xlu0 %73
    %75 = vset.pattern.permute.xlu0 0
    %76 = vperm.xlu0 %75, %v59
    %v77 = vpop.permute.xlu0 %76
    %78 = vset.pattern.permute.xlu0 0
    %79 = vperm.xlu0 %78, %v60
    %v80 = vpop.permute.xlu0 %79
    %81 = vset.pattern.permute.xlu0 0
    %82 = vperm.xlu0 %81, %v61
    %v83 = vpop.permute.xlu0 %82
    %84 = vset.pattern.permute.xlu0 0
    %85 = vperm.xlu0 %84, %v62
    %v86 = vpop.permute.xlu0 %85
    %87 = vset.pattern.permute.xlu0 0
    %88 = vperm.xlu0 %87, %v63
    %v89 = vpop.permute.xlu0 %88
    %vm90 = vcmp.eq.s32.totalorder %v68, %v65
    %vm91 = vcmp.eq.s32.totalorder %v71, %v65
    %vm92 = vcmp.eq.s32.totalorder %v74, %v65
    %vm93 = vcmp.eq.s32.totalorder %v77, %v65
    %vm94 = vcmp.eq.s32.totalorder %v80, %v65
    %vm95 = vcmp.eq.s32.totalorder %v83, %v65
    %vm96 = vcmp.eq.s32.totalorder %v86, %v65
    %vm97 = vcmp.eq.s32.totalorder %v89, %v65
    %v98 = vsel %vm90, 1, 0
    %v99 = vsel %vm91, 1, 0
    %v100 = vsel %vm92, 1, 0
    %v101 = vsel %vm93, 1, 0
    %v102 = vsel %vm94, 1, 0
    %v103 = vsel %vm95, 1, 0
    %v104 = vsel %vm96, 1, 0
    %v105 = vsel %vm97, 1, 0
    %v106 = vcvt.s32.f32 %v98
    %v107 = vcvt.s32.f32 %v99
    %v108 = vcvt.s32.f32 %v100
    %v109 = vcvt.s32.f32 %v101
    %v110 = vcvt.s32.f32 %v102
    %v111 = vcvt.s32.f32 %v103
    %v112 = vcvt.s32.f32 %v104
    %v113 = vcvt.s32.f32 %v105
    %v114 = vrot.slane %v106, 4
    %v115 = vadd.f32 %v106, %v114
    %v116 = vrot.slane %v115, 2
    %v117 = vadd.f32 %v115, %v116
    %v118 = vrot.slane %v117, 1
    %v119 = vadd.f32 %v117, %v118
    %v120 = vrot.slane %v107, 4
    %v121 = vadd.f32 %v107, %v120
    %v122 = vrot.slane %v121, 2
    %v123 = vadd.f32 %v121, %v122
    %v124 = vrot.slane %v123, 1
    %v125 = vadd.f32 %v123, %v124
    %v126 = vrot.slane %v108, 4
    %v127 = vadd.f32 %v108, %v126
    %v128 = vrot.slane %v127, 2
    %v129 = vadd.f32 %v127, %v128
    %v130 = vrot.slane %v129, 1
    %v131 = vadd.f32 %v129, %v130
    %v132 = vrot.slane %v109, 4
    %v133 = vadd.f32 %v109, %v132
    %v134 = vrot.slane %v133, 2
    %v135 = vadd.f32 %v133, %v134
    %v136 = vrot.slane %v135, 1
    %v137 = vadd.f32 %v135, %v136
    %v138 = vrot.slane %v110, 4
    %v139 = vadd.f32 %v110, %v138
    %v140 = vrot.slane %v139, 2
    %v141 = vadd.f32 %v139, %v140
    %v142 = vrot.slane %v141, 1
    %v143 = vadd.f32 %v141, %v142
    %v144 = vrot.slane %v111, 4
    %v145 = vadd.f32 %v111, %v144
    %v146 = vrot.slane %v145, 2
    %v147 = vadd.f32 %v145, %v146
    %v148 = vrot.slane %v147, 1
    %v149 = vadd.f32 %v147, %v148
    %v150 = vrot.slane %v112, 4
    %v151 = vadd.f32 %v112, %v150
    %v152 = vrot.slane %v151, 2
    %v153 = vadd.f32 %v151, %v152
    %v154 = vrot.slane %v153, 1
    %v155 = vadd.f32 %v153, %v154
    %v156 = vrot.slane %v113, 4
    %v157 = vadd.f32 %v113, %v156
    %v158 = vrot.slane %v157, 2
    %v159 = vadd.f32 %v157, %v158
    %v160 = vrot.slane %v159, 1
    %v161 = vadd.f32 %v159, %v160
    %v162 = vmul.f32 %v119, 0.125
    %v163 = vmul.f32 %v125, 0.125
    %v164 = vmul.f32 %v131, 0.125
    %v165 = vmul.f32 %v137, 0.125
    %v166 = vmul.f32 %v143, 0.125
    %v167 = vmul.f32 %v149, 0.125
    %v168 = vmul.f32 %v155, 0.125
    %v169 = vmul.f32 %v161, 0.125
    %v170 = vpack.c.bf16 %v162, %v162
    %v171 = vpack.c.bf16 %v163, %v163
    %v172 = vpack.c.bf16 %v164, %v164
    %v173 = vpack.c.bf16 %v165, %v165
    %v174 = vpack.c.bf16 %v166, %v166
    %v175 = vpack.c.bf16 %v167, %v167
    %v176 = vpack.c.bf16 %v168, %v168
    %v177 = vpack.c.bf16 %v169, %v169
    %v178 = vld [vmem:[%s1] sm:$0xf]
    %v179 = vld [vmem:[%s1 + $0x4] sm:$0xf]
    %v180 = vld [vmem:[%s1 + $0x8] sm:$0xf]
    %v181 = vld [vmem:[%s1 + $0xc] sm:$0xf]
    %v182 = vld [vmem:[%s1 + $0x10] sm:$0xf]
    %v183 = vld [vmem:[%s1 + $0x14] sm:$0xf]
    %v184 = vld [vmem:[%s1 + $0x18] sm:$0xf]
    %v185 = vld [vmem:[%s1 + $0x1c] sm:$0xf]
    %v186 = vld [vmem:[%s1 + $0x20] sm:$0xf]
    %v187 = vld [vmem:[%s1 + $0x24] sm:$0xf]
    %v188 = vld [vmem:[%s1 + $0x28] sm:$0xf]
    %v189 = vld [vmem:[%s1 + $0x2c] sm:$0xf]
    %v190 = vld [vmem:[%s1 + $0x30] sm:$0xf]
    %v191 = vld [vmem:[%s1 + $0x34] sm:$0xf]
    %v192 = vld [vmem:[%s1 + $0x38] sm:$0xf]
    %v193 = vld [vmem:[%s1 + $0x3c] sm:$0xf]
    %v202 = vunpack.c.l.b16 %v170
    %v203 = vunpack.c.l.b16 %v171
    %v204 = vunpack.c.l.b16 %v172
    %v205 = vunpack.c.l.b16 %v173
    %v206 = vunpack.c.l.b16 %v174
    %v207 = vunpack.c.l.b16 %v175
    %v208 = vunpack.c.l.b16 %v176
    %v209 = vunpack.c.l.b16 %v177
    %vm210 = vcmask 1041409
    %v211 = vsel %vm210, %v203, %v202
    %vm212 = vcmask 1042434
    %v213 = vsel %vm212, %v204, %v211
    %vm214 = vcmask 1043459
    %v215 = vsel %vm214, %v205, %v213
    %vm216 = vcmask 1044484
    %v217 = vsel %vm216, %v206, %v215
    %vm218 = vcmask 1045509
    %v219 = vsel %vm218, %v207, %v217
    %vm220 = vcmask 1046534
    %v221 = vsel %vm220, %v208, %v219
    %vm222 = vcmask 1047559
    %v223 = vsel %vm222, %v209, %v221
    %v224 = vpack.c.b16 %v223, %v223
    %v242 = vunpack.c.l.b16 %v178
    %v243 = vunpack.c.l.b16 %v179
    %v244 = vunpack.c.l.b16 %v180
    %v245 = vunpack.c.l.b16 %v181
    %v246 = vunpack.c.l.b16 %v182
    %v247 = vunpack.c.l.b16 %v183
    %v248 = vunpack.c.l.b16 %v184
    %v249 = vunpack.c.l.b16 %v185
    %v250 = vunpack.c.l.b16 %v186
    %v251 = vunpack.c.l.b16 %v187
    %v252 = vunpack.c.l.b16 %v188
    %v253 = vunpack.c.l.b16 %v189
    %v254 = vunpack.c.l.b16 %v190
    %v255 = vunpack.c.l.b16 %v191
    %v256 = vunpack.c.l.b16 %v192
    %v257 = vunpack.c.l.b16 %v193
    %v258 = vpack.c.b16 %v243, %v242
    %v259 = vpack.c.b16 %v245, %v244
    %v260 = vpack.c.b16 %v247, %v246
    %v261 = vpack.c.b16 %v249, %v248
    %v262 = vpack.c.b16 %v251, %v250
    %v263 = vpack.c.b16 %v253, %v252
    %v264 = vpack.c.b16 %v255, %v254
    %v265 = vpack.c.b16 %v257, %v256
    %274 = vmatpush.bf16.msra.mxu0 %v265
    %275 = vmatpush.bf16.msra.mxu0 %v264
    %276 = vmatpush.bf16.msra.mxu0 %v263
    %277 = vmatpush.bf16.msra.mxu0 %v262
    %278 = vmatpush.bf16.msra.mxu0 %v261
    %279 = vmatpush.bf16.msra.mxu0 %v260
    %280 = vmatpush.bf16.msra.mxu0 %v259
    %281 = vmatpush.bf16.msra.mxu0 %v258
    %282 = vmatmul.bf16.gmra.mxu0 %v224
    %v283 = vpop.f32.mrf.mxu0
    %v284 = vadd.f32 0.0, %v283
    %v285 = vpop.f32.mrf.mxu0
    %286 = vdwg.mxu0
    %v287 = vpack.c.bf16 %v284, %v284
    %v288 = vld [vmem:[#allocation2] sm:$0xf]
    %v289 = vld [vmem:[#allocation2 + $0x4] sm:$0xf]
    %v290 = vld [vmem:[#allocation2 + $0x8] sm:$0xf]
    %v291 = vld [vmem:[#allocation2 + $0xc] sm:$0xf]
    %v292 = vld [vmem:[#allocation2 + $0x10] sm:$0xf]
    %v293 = vld [vmem:[#allocation2 + $0x14] sm:$0xf]
    %v294 = vld [vmem:[#allocation2 + $0x18] sm:$0xf]
    %v295 = vld [vmem:[#allocation2 + $0x1c] sm:$0xf]
    %v296 = vld [vmem:[#allocation2 + $0x20] sm:$0xf]
    %v297 = vld [vmem:[#allocation2 + $0x24] sm:$0xf]
    %v298 = vld [vmem:[#allocation2 + $0x28] sm:$0xf]
    %v299 = vld [vmem:[#allocation2 + $0x2c] sm:$0xf]
    %v300 = vld [vmem:[#allocation2 + $0x30] sm:$0xf]
    %v301 = vld [vmem:[#allocation2 + $0x34] sm:$0xf]
    %v302 = vld [vmem:[#allocation2 + $0x38] sm:$0xf]
    %v303 = vld [vmem:[#allocation2 + $0x3c] sm:$0xf]
    %v304 = vld [vmem:[%s3] sm:$0x1]
    %v306 = vperm.slane %v304, 0
    %v324 = vunpack.c.l.b16 %v288
    %v325 = vunpack.c.l.b16 %v289
    %v326 = vunpack.c.l.b16 %v290
    %v327 = vunpack.c.l.b16 %v291
    %v328 = vunpack.c.l.b16 %v292
    %v329 = vunpack.c.l.b16 %v293
    %v330 = vunpack.c.l.b16 %v294
    %v331 = vunpack.c.l.b16 %v295
    %v332 = vunpack.c.l.b16 %v296
    %v333 = vunpack.c.l.b16 %v297
    %v334 = vunpack.c.l.b16 %v298
    %v335 = vunpack.c.l.b16 %v299
    %v336 = vunpack.c.l.b16 %v300
    %v337 = vunpack.c.l.b16 %v301
    %v338 = vunpack.c.l.b16 %v302
    %v339 = vunpack.c.l.b16 %v303
    %v340 = vpack.c.b16 %v325, %v324
    %v341 = vpack.c.b16 %v327, %v326
    %v342 = vpack.c.b16 %v329, %v328
    %v343 = vpack.c.b16 %v331, %v330
    %v344 = vpack.c.b16 %v333, %v332
    %v345 = vpack.c.b16 %v335, %v334
    %v346 = vpack.c.b16 %v337, %v336
    %v347 = vpack.c.b16 %v339, %v338
    %356 = vmatpush.bf16.msra.mxu0 %v347
    %357 = vmatpush.bf16.msra.mxu0 %v346
    %358 = vmatpush.bf16.msra.mxu0 %v345
    %359 = vmatpush.bf16.msra.mxu0 %v344
    %360 = vmatpush.bf16.msra.mxu0 %v343
    %361 = vmatpush.bf16.msra.mxu0 %v342
    %362 = vmatpush.bf16.msra.mxu0 %v341
    %363 = vmatpush.bf16.msra.mxu0 %v340
    %364 = vmatmul.bf16.gmra.mxu0 %v287
    %v365 = vpop.f32.mrf.mxu0
    %v366 = vadd.f32 %v306, %v365
    %v367 = vpop.f32.mrf.mxu0
    %368 = vdwg.mxu0
    %v369 = vmax.f32 %v366, 0.0
    %v370 = vpack.c.bf16 %v369, %v369
    %v371 = vld [vmem:[#allocation5] sm:$0xf]
    %v372 = vld [vmem:[#allocation5 + $0x4] sm:$0xf]
    %v373 = vld [vmem:[#allocation5 + $0x8] sm:$0xf]
    %v374 = vld [vmem:[#allocation5 + $0xc] sm:$0xf]
    %v375 = vld [vmem:[#allocation5 + $0x10] sm:$0xf]
    %v376 = vld [vmem:[#allocation5 + $0x14] sm:$0xf]
    %v377 = vld [vmem:[#allocation5 + $0x18] sm:$0xf]
    %v378 = vld [vmem:[#allocation5 + $0x1c] sm:$0xf]
    %v379 = vld [vmem:[#allocation5 + $0x20] sm:$0xf]
    %v380 = vld [vmem:[#allocation5 + $0x24] sm:$0xf]
    %v381 = vld [vmem:[#allocation5 + $0x28] sm:$0xf]
    %v382 = vld [vmem:[#allocation5 + $0x2c] sm:$0xf]
    %v383 = vld [vmem:[#allocation5 + $0x30] sm:$0xf]
    %v384 = vld [vmem:[#allocation5 + $0x34] sm:$0xf]
    %v385 = vld [vmem:[#allocation5 + $0x38] sm:$0xf]
    %v386 = vld [vmem:[#allocation5 + $0x3c] sm:$0xf]
    %v387 = vld [vmem:[%s5] sm:$0x1]
    %v389 = vperm.slane %v387, 0
    %v407 = vunpack.c.l.b16 %v371
    %v408 = vunpack.c.l.b16 %v372
    %v409 = vunpack.c.l.b16 %v373
    %v410 = vunpack.c.l.b16 %v374
    %v411 = vunpack.c.l.b16 %v375
    %v412 = vunpack.c.l.b16 %v376
    %v413 = vunpack.c.l.b16 %v377
    %v414 = vunpack.c.l.b16 %v378
    %v415 = vunpack.c.l.b16 %v379
    %v416 = vunpack.c.l.b16 %v380
    %v417 = vunpack.c.l.b16 %v381
    %v418 = vunpack.c.l.b16 %v382
    %v419 = vunpack.c.l.b16 %v383
    %v420 = vunpack.c.l.b16 %v384
    %v421 = vunpack.c.l.b16 %v385
    %v422 = vunpack.c.l.b16 %v386
    %v423 = vpack.c.b16 %v408, %v407
    %v424 = vpack.c.b16 %v410, %v409
    %v425 = vpack.c.b16 %v412, %v411
    %v426 = vpack.c.b16 %v414, %v413
    %v427 = vpack.c.b16 %v416, %v415
    %v428 = vpack.c.b16 %v418, %v417
    %v429 = vpack.c.b16 %v420, %v419
    %v430 = vpack.c.b16 %v422, %v421
    %439 = vmatpush.bf16.msra.mxu0 %v430
    %440 = vmatpush.bf16.msra.mxu0 %v429
    %441 = vmatpush.bf16.msra.mxu0 %v428
    %442 = vmatpush.bf16.msra.mxu0 %v427
    %443 = vmatpush.bf16.msra.mxu0 %v426
    %444 = vmatpush.bf16.msra.mxu0 %v425
    %445 = vmatpush.bf16.msra.mxu0 %v424
    %446 = vmatpush.bf16.msra.mxu0 %v423
    %447 = vmatmul.bf16.gmra.mxu0 %v370
    %v448 = vpop.f32.mrf.mxu0
    %v449 = vadd.f32 %v389, %v448
    %v450 = vpop.f32.mrf.mxu0
    %451 = vdwg.mxu0
    %452 = vst [vmem:[#allocation7] sm:$0xff] %v449
    // Predicated region
    $region34: #{tpu_custom_call.1} parent=1 // pred_check
      _
    $region35: #{tpu_custom_call.1} parent=1 // pred_check_branch
      %454 = sbr.rel (0) target = $region37
    $region36: #{tpu_custom_call.1} parent=1 // pred_region
      %456 = vsyncadd [#allocation4], 0
      %s458 = sshll.u32 [#allocation7], 4
      %s459 = int_to_ptr.vmem [resolvable:$true] %s458
      %s460 = sshll.u32 %s6, 4
      %s461 = int_to_ptr.hbm [resolvable:$true] %s460
      %463 = dma.vmem_to_hbm [thread:$0]  %s459, 128, %s461, [#allocation4]
    $region37: #{tpu_custom_call.1} parent=1 // pred_fallthru
      _
    // Predicated region
    $region38: #{tpu_custom_call.1} parent=1 // pred_check
      _
    $region39: #{tpu_custom_call.1} parent=1 // pred_check_branch
      %465 = sbr.rel (0) target = $region41
    $region40: #{tpu_custom_call.1} parent=1 // pred_region
      %467 = dma.done [#allocation4], 128
    $region41: #{tpu_custom_call.1} parent=1 // pred_fallthru
      _
    %468 = vsyncpa [#allocation3], 1
    %469 = vsyncpa [#allocation6], 1
    %470 = vsyncpa [#allocation4], 1

</llo_original>
